<compile_context>
chip_gen: v7x
topology: tpu7x:2x2x1
jax: 0.10.0
libtpu: 0.0.40
codegen_flags: <defaults>
</compile_context>

<pallas_src>
import jax
import jax.numpy as jnp
from jax import lax
from jax.experimental import pallas as pl
from jax.experimental.pallas import tpu as pltpu

IGNORE_INDEX = -100
_LANES = 128


def _num_tc_shards():
    # Only emit the 2-way split on chips with 2 TensorCores per device
    # (v7x, and v4/v5p megacore).  On v5e/v6e it is pure waste.
    try:
        kind = jax.devices()[0].device_kind.lower()
    except Exception:
        return 1
    return 2 if any(k in kind for k in ("v7", "v4", "v5p")) else 1


def fcce_loss(logits_nchw, target_nhw, class_weight=None, *, tile_bytes_hint=4 << 20):
    """CrossEntropyLoss(weight=class_weight, ignore_index=-100, reduction='mean').

    logits_nchw: (N, C, H, W) float32/bfloat16
    target_nhw:  (N, H, W) int
    class_weight: (C,) float32 or None (-> unweighted)
    Returns a scalar float32 loss.
    """
    N, C, H, W = logits_nchw.shape
    S = H * W
    if class_weight is None:
        class_weight = jnp.ones((C,), jnp.float32)
    w = class_weight.astype(jnp.float32).reshape(C)

    itemsize = int(jnp.dtype(logits_nchw.dtype).itemsize)
    # Row-chunk granularity: 8 f32 sublanes, scaled for packed dtypes so chunk
    # slices stay aligned to packed sublane tiles (16 for bf16, 32 for int8/fp8).
    RC = 8 * max(1, 4 // itemsize)

    R = -(-S // _LANES)                                  # spatial rows of 128 lanes

    # ---- tile selection: ~tile_bytes_hint of logits per grid step --------------
    rows_hint = tile_bytes_hint // (C * _LANES * itemsize)
    rows_hint = max(RC, (rows_hint // RC) * RC)
    R_rc = -(-R // RC) * RC                              # R rounded up to chunk size
    TR = min(rows_hint, R_rc)
    num_chunks = TR // RC
    if num_chunks > 8:
        # keep the in-kernel row loop trip count a multiple of the unroll factor
        num_chunks = (num_chunks // 8) * 8
        TR = num_chunks * RC
        unroll = 8
    else:
        unroll = num_chunks
    # TODO(synk): for vocab-scale C (>= ~256) the (C, TR, 128) block should be
    # chunked over C with an online LSE (block won't fit VMEM); unnecessary for
    # segmentation-sized C.

    tiles_needed = -(-R // TR)
    num_shards = _num_tc_shards() if tiles_needed >= 2 else 1
    tiles_per_shard = -(-tiles_needed // num_shards)
    R_pad = num_shards * tiles_per_shard * TR
    S_pad = R_pad * _LANES

    # ---- layout plumbing: contiguous reshapes; single pad when S_pad != S ------
    x = logits_nchw.reshape(N, C, S)
    t = target_nhw.reshape(N, 1, S).astype(jnp.int32)
    if S_pad != S:
        # Padded logits are finite zeros and padded targets are IGNORE_INDEX, so
        # padded pixels contribute exactly 0 to numerator and denominator — no
        # per-pixel index mask is needed inside the kernel.
        x = jnp.pad(x, ((0, 0), (0, 0), (0, S_pad - S)))
        t = jnp.pad(t, ((0, 0), (0, 0), (0, S_pad - S)), constant_values=IGNORE_INDEX)
    x = x.reshape(N, C, R_pad, _LANES)                   # free (contiguous split)
    t = t.reshape(N, 1, R_pad, _LANES)

    grid = (N, num_shards, tiles_per_shard)

    def x_map(n, h, s, w_ref):
        return (n, 0, h * tiles_per_shard + s, 0)

    def t_map(n, h, s, w_ref):
        return (n, 0, h * tiles_per_shard + s, 0)

    def o_map(n, h, s, w_ref):
        return (n, h, 0, 0)

    def kernel(w_ref, x_ref, t_ref, loss_ref, den_ref, acc_ref):
        # w_ref:   SMEM (C,) f32 class weights (scalar prefetch)
        # x_ref:   VMEM (1, C, TR, 128) logits tile (native dtype)
        # t_ref:   VMEM (1, 1, TR, 128) int32 targets
        # loss_ref/den_ref: (1,1,1,1) f32 per-(n,shard) outputs (resident over s)
        # acc_ref: VMEM (2, RC, 128) f32 vreg-shaped partial sums (resident over s)
        s = pl.program_id(2)

        @pl.when(s == 0)
        def _():
            acc_ref[...] = jnp.zeros_like(acc_ref)
            loss_ref[...] = jnp.zeros_like(loss_ref)
            den_ref[...] = jnp.zeros_like(den_ref)

        wvals = [w_ref[c] for c in range(C)]             # SMEM scalar reads, hoisted

        def chunk_body(r, carry):
            lp, dp = carry                               # (RC,128) f32, live in vregs
            r0 = pl.multiple_of(r * RC, RC)
            tgt = t_ref[0, 0, pl.ds(r0, RC), :]          # (RC,128) i32
            # pass 1: max over classes, native dtype (bf16 stays bf16 on v6e/v7x)
            m = x_ref[0, 0, pl.ds(r0, RC), :]
            for c in range(1, C):
                m = jnp.maximum(m, x_ref[0, c, pl.ds(r0, RC), :])
            m = m.astype(jnp.float32)
            # pass 2: exp-sum + gather target logit & class weight.
            # Two-pass kept on purpose: online softmax would add a second exp per
            # class per vreg and make the single EUP slot the binding unit.
            ssum = jnp.zeros((RC, _LANES), jnp.float32)
            picked = jnp.zeros((RC, _LANES), jnp.float32)
            wt = jnp.zeros((RC, _LANES), jnp.float32)
            for c in range(C):
                xc = x_ref[0, c, pl.ds(r0, RC), :].astype(jnp.float32)
                ssum = ssum + jnp.exp(xc - m)
                hit = tgt == c
                picked = jnp.where(hit, xc, picked)
                wt = jnp.where(hit, wvals[c], wt)
            # NOTE: targets outside [0, C) other than IGNORE_INDEX silently
            # contribute 0 (PyTorch would raise); ignored / padded pixels have
            # wt == 0, so no explicit validity mask is required.
            nll = m + jnp.log(ssum) - picked
            return (lp + wt * nll, dp + wt)

        zero = jnp.zeros((RC, _LANES), jnp.float32)
        lp, dp = lax.fori_loop(0, num_chunks, chunk_body, (zero, zero),
                               unroll=unroll)
        acc_ref[0, :, :] = acc_ref[0, :, :] + lp
        acc_ref[1, :, :] = acc_ref[1, :, :] + dp

        @pl.when(s == pl.num_programs(2) - 1)
        def _():
            loss_ref[...] += jnp.sum(acc_ref[0, :, :])
            den_ref[...] += jnp.sum(acc_ref[1, :, :])

    block_bytes = C * TR * _LANES * itemsize + TR * _LANES * 4
    # ~3x the working set (double-buffered inputs) + headroom, capped at 32 MiB so
    # it stays well inside v7x's 64 MiB VMEM (v5e/v6e have 128 MiB).
    vmem_bytes = int(min(32 << 20, 3 * block_bytes + (8 << 20)))

    loss_parts, den_parts = pl.pallas_call(
        kernel,
        out_shape=(
            jax.ShapeDtypeStruct((N, num_shards, 1, 1), jnp.float32),
            jax.ShapeDtypeStruct((N, num_shards, 1, 1), jnp.float32),
        ),
        grid_spec=pltpu.PrefetchScalarGridSpec(
            num_scalar_prefetch=1,
            grid=grid,
            in_specs=[
                pl.BlockSpec((1, C, TR, _LANES), x_map),
                pl.BlockSpec((1, 1, TR, _LANES), t_map),
            ],
            out_specs=[
                pl.BlockSpec((1, 1, 1, 1), o_map),
                pl.BlockSpec((1, 1, 1, 1), o_map),
            ],
            scratch_shapes=[pltpu.VMEM((2, RC, _LANES), jnp.float32)],
        ),
        compiler_params=pltpu.CompilerParams(
            dimension_semantics=("parallel", "parallel", "arbitrary"),
            vmem_limit_bytes=vmem_bytes,
        ),
    )(w, x, t)

    # reduction='mean' with class weights => weighted mean over non-ignored pixels.
    # NOTE: 0/0 -> NaN if every contributing pixel is ignored or has weight 0,
    # matching PyTorch semantics.
    return (jnp.sum(loss_parts) / jnp.sum(den_parts)).astype(jnp.float32)


def _reference_ce(logits_nchw, target_nhw, class_weight):
    """Pure-JAX reference of nn.CrossEntropyLoss(weight, ignore_index=-100)."""
    N, C, H, W = logits_nchw.shape
    x = jnp.transpose(logits_nchw, (0, 2, 3, 1)).reshape(-1, C).astype(jnp.float32)
    t = target_nhw.reshape(-1)
    valid = t != IGNORE_INDEX
    t_safe = jnp.where(valid, t, 0)
    logp = jax.nn.log_softmax(x, axis=-1)
    nll = -jnp.take_along_axis(logp, t_safe[:, None], axis=-1)[:, 0]
    wt = class_weight[t_safe]
    vm = valid.astype(jnp.float32)
    return jnp.sum(wt * nll * vm) / jnp.sum(wt * vm)


if __name__ == "__main__":
    key = jax.random.PRNGKey(0)

    # Primary small config (N=2, C=4, H=W=16) matching the module's NCHW/NHW usage.
    N, C, H, W = 2, 4, 16, 16
    k1, k2 = jax.random.split(key)
    logits = jax.random.normal(k1, (N, C, H, W), dtype=jnp.float32)
    target = jax.random.randint(k2, (N, H, W), 0, C, dtype=jnp.int32)
    # sprinkle a few ignore_index entries to exercise the ignore path
    target = target.at[0, 0, 0].set(IGNORE_INDEX)
    target = target.at[1, 3, 7].set(IGNORE_INDEX)
    # deterministic synthetic class weights (cfg.LOSS.CLASS_WEIGHT analogue)
    class_weight = jnp.array([1.0, 0.5, 2.0, 1.5], dtype=jnp.float32)

    loss = jax.block_until_ready(fcce_loss(logits, target, class_weight))
    ref = _reference_ce(logits, target, class_weight)
    assert jnp.allclose(loss, ref, rtol=1e-5, atol=1e-5), (loss, ref)

    # Odd spatial size exercises the pad-to-tile path (H*W not a multiple of 128).
    k3, k4 = jax.random.split(k1)
    logits2 = jax.random.normal(k3, (1, 3, 9, 7), dtype=jnp.float32)
    target2 = jax.random.randint(k4, (1, 9, 7), 0, 3, dtype=jnp.int32)
    target2 = target2.at[0, 0, 0].set(IGNORE_INDEX)
    loss2 = jax.block_until_ready(fcce_loss(logits2, target2, None))
    ref2 = _reference_ce(logits2, target2, jnp.ones((3,), jnp.float32))
    assert jnp.allclose(loss2, ref2, rtol=1e-5, atol=1e-5), (loss2, ref2)

    print("KERNEL_OK")
</pallas_src>

<mosaic_0001>
module attributes {stable_mosaic.version = 11 : i64} {
  func.func @kernel(%arg0: i32, %arg1: i32, %arg2: i32, %arg3: memref<4xf32, #tpu.memory_space<smem>>, %arg4: memref<1x4x8x128xf32, #tpu.memory_space<vmem>>, %arg5: memref<1x1x8x128xi32, #tpu.memory_space<vmem>>, %arg6: memref<1x1x1x1xf32, #tpu.memory_space<vmem>>, %arg7: memref<1x1x1x1xf32, #tpu.memory_space<vmem>>, %arg8: memref<2x8x128xf32, #tpu.memory_space<vmem>>) attributes {dimension_semantics = [#tpu.dimension_semantics<parallel>, #tpu.dimension_semantics<parallel>, #tpu.dimension_semantics<arbitrary>], iteration_bounds = array<i64: 2, 1, 1>, scalar_prefetch = 1 : i64, scratch_operands = 1 : i64, tpu.core_type = #tpu.core_type<tc>, window_params = [{transform_indices = @transform_0, window_bounds = array<i64: 1, 4, 8, 128>}, {transform_indices = @transform_1, window_bounds = array<i64: 1, 1, 8, 128>}, {transform_indices = @transform_2, window_bounds = array<i64: 1, 1, 1, 1>}, {transform_indices = @transform_3, window_bounds = array<i64: 1, 1, 1, 1>}]} {
    %c0_i32 = arith.constant 0 : i32
    %0 = arith.cmpi eq, %arg2, %c0_i32 : i32
    %1 = arith.extui %0 : i1 to i32
    %c0_i32_0 = arith.constant 0 : i32
    %2 = arith.cmpi ne, %1, %c0_i32_0 : i32
    scf.if %2 {
      %cst_48 = arith.constant 0.000000e+00 : f32
      %96 = vector.broadcast %cst_48 : f32 to vector<2x8x128xf32>
      %c0_49 = arith.constant 0 : index
      %c0_50 = arith.constant 0 : index
      %c0_51 = arith.constant 0 : index
      %97 = vector.load %arg8[%c0_49, %c0_50, %c0_51] : memref<2x8x128xf32, #tpu.memory_space<vmem>>, vector<2x8x128xf32>
      tpu.vector_store %arg8[%c0_49, %c0_50, %c0_51], %96 {strides = array<i32>} : memref<2x8x128xf32, #tpu.memory_space<vmem>>, vector<2x8x128xf32>,
      %cst_52 = arith.constant 0.000000e+00 : f32
      %98 = vector.broadcast %cst_52 : f32 to vector<1x1x1x1xf32>
      %c0_53 = arith.constant 0 : index
      %c0_54 = arith.constant 0 : index
      %c0_55 = arith.constant 0 : index
      %c0_56 = arith.constant 0 : index
      %99 = vector.load %arg6[%c0_53, %c0_54, %c0_55, %c0_56] : memref<1x1x1x1xf32, #tpu.memory_space<vmem>>, vector<1x1x1x1xf32>
      tpu.vector_store %arg6[%c0_53, %c0_54, %c0_55, %c0_56], %98 {strides = array<i32>} : memref<1x1x1x1xf32, #tpu.memory_space<vmem>>, vector<1x1x1x1xf32>,
      %cst_57 = arith.constant 0.000000e+00 : f32
      %100 = vector.broadcast %cst_57 : f32 to vector<1x1x1x1xf32>
      %c0_58 = arith.constant 0 : index
      %c0_59 = arith.constant 0 : index
      %c0_60 = arith.constant 0 : index
      %c0_61 = arith.constant 0 : index
      %101 = vector.load %arg7[%c0_58, %c0_59, %c0_60, %c0_61] : memref<1x1x1x1xf32, #tpu.memory_space<vmem>>, vector<1x1x1x1xf32>
      tpu.vector_store %arg7[%c0_58, %c0_59, %c0_60, %c0_61], %100 {strides = array<i32>} : memref<1x1x1x1xf32, #tpu.memory_space<vmem>>, vector<1x1x1x1xf32>,
    } else {
    }
    %c0 = arith.constant 0 : index
    %3 = memref.load %arg3[%c0] : memref<4xf32, #tpu.memory_space<smem>>
    %c1 = arith.constant 1 : index
    %4 = memref.load %arg3[%c1] : memref<4xf32, #tpu.memory_space<smem>>
    %c2 = arith.constant 2 : index
    %5 = memref.load %arg3[%c2] : memref<4xf32, #tpu.memory_space<smem>>
    %c3 = arith.constant 3 : index
    %6 = memref.load %arg3[%c3] : memref<4xf32, #tpu.memory_space<smem>>
    %cst = arith.constant 0.000000e+00 : f32
    %7 = vector.broadcast %cst : f32 to vector<8x128xf32>
    %c0_i32_1 = arith.constant 0 : i32
    %c8_i32 = arith.constant 8 : i32
    %8 = arith.muli %c0_i32_1, %c8_i32 : i32
    %9 = tpu.assume_multiple %8, 8 : i32
    %c0_2 = arith.constant 0 : index
    %c0_3 = arith.constant 0 : index
    %10 = arith.index_cast %9 : i32 to index
    %c0_4 = arith.constant 0 : index
    %11 = vector.load %arg5[%c0_2, %c0_3, %10, %c0_4] : memref<1x1x8x128xi32, #tpu.memory_space<vmem>>, vector<1x1x8x128xi32>
    %12 = vector.shape_cast %11 : vector<1x1x8x128xi32> to vector<8x128xi32>
    %c0_5 = arith.constant 0 : index
    %c0_6 = arith.constant 0 : index
    %13 = arith.index_cast %9 : i32 to index
    %c0_7 = arith.constant 0 : index
    %14 = vector.load %arg4[%c0_5, %c0_6, %13, %c0_7] : memref<1x4x8x128xf32, #tpu.memory_space<vmem>>, vector<1x1x8x128xf32>
    %15 = vector.shape_cast %14 : vector<1x1x8x128xf32> to vector<8x128xf32>
    %c0_8 = arith.constant 0 : index
    %c1_9 = arith.constant 1 : index
    %16 = arith.index_cast %9 : i32 to index
    %c0_10 = arith.constant 0 : index
    %17 = vector.load %arg4[%c0_8, %c1_9, %16, %c0_10] : memref<1x4x8x128xf32, #tpu.memory_space<vmem>>, vector<1x1x8x128xf32>
    %18 = vector.shape_cast %17 : vector<1x1x8x128xf32> to vector<8x128xf32>
    %19 = arith.maximumf %15, %18 : vector<8x128xf32>
    %c0_11 = arith.constant 0 : index
    %c2_12 = arith.constant 2 : index
    %20 = arith.index_cast %9 : i32 to index
    %c0_13 = arith.constant 0 : index
    %21 = vector.load %arg4[%c0_11, %c2_12, %20, %c0_13] : memref<1x4x8x128xf32, #tpu.memory_space<vmem>>, vector<1x1x8x128xf32>
    %22 = vector.shape_cast %21 : vector<1x1x8x128xf32> to vector<8x128xf32>
    %23 = arith.maximumf %19, %22 : vector<8x128xf32>
    %c0_14 = arith.constant 0 : index
    %c3_15 = arith.constant 3 : index
    %24 = arith.index_cast %9 : i32 to index
    %c0_16 = arith.constant 0 : index
    %25 = vector.load %arg4[%c0_14, %c3_15, %24, %c0_16] : memref<1x4x8x128xf32, #tpu.memory_space<vmem>>, vector<1x1x8x128xf32>
    %26 = vector.shape_cast %25 : vector<1x1x8x128xf32> to vector<8x128xf32>
    %27 = arith.maximumf %23, %26 : vector<8x128xf32>
    %cst_17 = arith.constant 0.000000e+00 : f32
    %28 = vector.broadcast %cst_17 : f32 to vector<8x128xf32>
    %cst_18 = arith.constant 0.000000e+00 : f32
    %29 = vector.broadcast %cst_18 : f32 to vector<8x128xf32>
    %cst_19 = arith.constant 0.000000e+00 : f32
    %30 = vector.broadcast %cst_19 : f32 to vector<8x128xf32>
    %c0_20 = arith.constant 0 : index
    %c0_21 = arith.constant 0 : index
    %31 = arith.index_cast %9 : i32 to index
    %c0_22 = arith.constant 0 : index
    %32 = vector.load %arg4[%c0_20, %c0_21, %31, %c0_22] : memref<1x4x8x128xf32, #tpu.memory_space<vmem>>, vector<1x1x8x128xf32>
    %33 = vector.shape_cast %32 : vector<1x1x8x128xf32> to vector<8x128xf32>
    %34 = arith.subf %33, %27 : vector<8x128xf32>
    %35 = math.exp %34 : vector<8x128xf32>
    %36 = arith.addf %28, %35 : vector<8x128xf32>
    %c0_i32_23 = arith.constant 0 : i32
    %37 = vector.broadcast %c0_i32_23 : i32 to vector<8x128xi32>
    %38 = arith.cmpi eq, %12, %37 : vector<8x128xi32>
    %39 = arith.select %38, %33, %29 : vector<8x128xi1>, vector<8x128xf32>
    %40 = vector.broadcast %3 : f32 to vector<8x128xf32>
    %41 = arith.select %38, %40, %30 : vector<8x128xi1>, vector<8x128xf32>
    %c0_24 = arith.constant 0 : index
    %c1_25 = arith.constant 1 : index
    %42 = arith.index_cast %9 : i32 to index
    %c0_26 = arith.constant 0 : index
    %43 = vector.load %arg4[%c0_24, %c1_25, %42, %c0_26] : memref<1x4x8x128xf32, #tpu.memory_space<vmem>>, vector<1x1x8x128xf32>
    %44 = vector.shape_cast %43 : vector<1x1x8x128xf32> to vector<8x128xf32>
    %45 = arith.subf %44, %27 : vector<8x128xf32>
    %46 = math.exp %45 : vector<8x128xf32>
    %47 = arith.addf %36, %46 : vector<8x128xf32>
    %c1_i32 = arith.constant 1 : i32
    %48 = vector.broadcast %c1_i32 : i32 to vector<8x128xi32>
    %49 = arith.cmpi eq, %12, %48 : vector<8x128xi32>
    %50 = arith.select %49, %44, %39 : vector<8x128xi1>, vector<8x128xf32>
    %51 = vector.broadcast %4 : f32 to vector<8x128xf32>
    %52 = arith.select %49, %51, %41 : vector<8x128xi1>, vector<8x128xf32>
    %c0_27 = arith.constant 0 : index
    %c2_28 = arith.constant 2 : index
    %53 = arith.index_cast %9 : i32 to index
    %c0_29 = arith.constant 0 : index
    %54 = vector.load %arg4[%c0_27, %c2_28, %53, %c0_29] : memref<1x4x8x128xf32, #tpu.memory_space<vmem>>, vector<1x1x8x128xf32>
    %55 = vector.shape_cast %54 : vector<1x1x8x128xf32> to vector<8x128xf32>
    %56 = arith.subf %55, %27 : vector<8x128xf32>
    %57 = math.exp %56 : vector<8x128xf32>
    %58 = arith.addf %47, %57 : vector<8x128xf32>
    %c2_i32 = arith.constant 2 : i32
    %59 = vector.broadcast %c2_i32 : i32 to vector<8x128xi32>
    %60 = arith.cmpi eq, %12, %59 : vector<8x128xi32>
    %61 = arith.select %60, %55, %50 : vector<8x128xi1>, vector<8x128xf32>
    %62 = vector.broadcast %5 : f32 to vector<8x128xf32>
    %63 = arith.select %60, %62, %52 : vector<8x128xi1>, vector<8x128xf32>
    %c0_30 = arith.constant 0 : index
    %c3_31 = arith.constant 3 : index
    %64 = arith.index_cast %9 : i32 to index
    %c0_32 = arith.constant 0 : index
    %65 = vector.load %arg4[%c0_30, %c3_31, %64, %c0_32] : memref<1x4x8x128xf32, #tpu.memory_space<vmem>>, vector<1x1x8x128xf32>
    %66 = vector.shape_cast %65 : vector<1x1x8x128xf32> to vector<8x128xf32>
    %67 = arith.subf %66, %27 : vector<8x128xf32>
    %68 = math.exp %67 : vector<8x128xf32>
    %69 = arith.addf %58, %68 : vector<8x128xf32>
    %c3_i32 = arith.constant 3 : i32
    %70 = vector.broadcast %c3_i32 : i32 to vector<8x128xi32>
    %71 = arith.cmpi eq, %12, %70 : vector<8x128xi32>
    %72 = arith.select %71, %66, %61 : vector<8x128xi1>, vector<8x128xf32>
    %73 = vector.broadcast %6 : f32 to vector<8x128xf32>
    %74 = arith.select %71, %73, %63 : vector<8x128xi1>, vector<8x128xf32>
    %75 = math.log %69 : vector<8x128xf32>
    %76 = arith.addf %27, %75 : vector<8x128xf32>
    %77 = arith.subf %76, %72 : vector<8x128xf32>
    %78 = arith.mulf %74, %77 : vector<8x128xf32>
    %79 = arith.addf %7, %78 : vector<8x128xf32>
    %80 = arith.addf %7, %74 : vector<8x128xf32>
    %c1_i32_33 = arith.constant 1 : i32
    %c0_34 = arith.constant 0 : index
    %c0_35 = arith.constant 0 : index
    %c0_36 = arith.constant 0 : index
    %81 = vector.load %arg8[%c0_34, %c0_35, %c0_36] : memref<2x8x128xf32, #tpu.memory_space<vmem>>, vector<1x8x128xf32>
    %82 = vector.shape_cast %81 : vector<1x8x128xf32> to vector<8x128xf32>
    %83 = arith.addf %82, %79 : vector<8x128xf32>
    %c0_37 = arith.constant 0 : index
    %c0_38 = arith.constant 0 : index
    %c0_39 = arith.constant 0 : index
    %84 = vector.load %arg8[%c0_37, %c0_38, %c0_39] : memref<2x8x128xf32, #tpu.memory_space<vmem>>, vector<1x8x128xf32>
    %85 = vector.shape_cast %84 : vector<1x8x128xf32> to vector<8x128xf32>
    %86 = vector.shape_cast %83 : vector<8x128xf32> to vector<1x8x128xf32>
    tpu.vector_store %arg8[%c0_37, %c0_38, %c0_39], %86 {strides = array<i32>} : memref<2x8x128xf32, #tpu.memory_space<vmem>>, vector<1x8x128xf32>,
    %c1_40 = arith.constant 1 : index
    %c0_41 = arith.constant 0 : index
    %c0_42 = arith.constant 0 : index
    %87 = vector.load %arg8[%c1_40, %c0_41, %c0_42] : memref<2x8x128xf32, #tpu.memory_space<vmem>>, vector<1x8x128xf32>
    %88 = vector.shape_cast %87 : vector<1x8x128xf32> to vector<8x128xf32>
    %89 = arith.addf %88, %80 : vector<8x128xf32>
    %c1_43 = arith.constant 1 : index
    %c0_44 = arith.constant 0 : index
    %c0_45 = arith.constant 0 : index
    %90 = vector.load %arg8[%c1_43, %c0_44, %c0_45] : memref<2x8x128xf32, #tpu.memory_space<vmem>>, vector<1x8x128xf32>
    %91 = vector.shape_cast %90 : vector<1x8x128xf32> to vector<8x128xf32>
    %92 = vector.shape_cast %89 : vector<8x128xf32> to vector<1x8x128xf32>
    tpu.vector_store %arg8[%c1_43, %c0_44, %c0_45], %92 {strides = array<i32>} : memref<2x8x128xf32, #tpu.memory_space<vmem>>, vector<1x8x128xf32>,
    %c0_i32_46 = arith.constant 0 : i32
    %93 = arith.cmpi eq, %arg2, %c0_i32_46 : i32
    %94 = arith.extui %93 : i1 to i32
    %c0_i32_47 = arith.constant 0 : i32
    %95 = arith.cmpi ne, %94, %c0_i32_47 : i32
    scf.if %95 {
      %c0_48 = arith.constant 0 : index
      %c0_49 = arith.constant 0 : index
      %c0_50 = arith.constant 0 : index
      %c0_51 = arith.constant 0 : index
      %96 = vector.load %arg6[%c0_48, %c0_49, %c0_50, %c0_51] : memref<1x1x1x1xf32, #tpu.memory_space<vmem>>, vector<1x1x1x1xf32>
      %c0_52 = arith.constant 0 : index
      %c0_53 = arith.constant 0 : index
      %c0_54 = arith.constant 0 : index
      %97 = vector.load %arg8[%c0_52, %c0_53, %c0_54] : memref<2x8x128xf32, #tpu.memory_space<vmem>>, vector<1x8x128xf32>
      %98 = vector.shape_cast %97 : vector<1x8x128xf32> to vector<8x128xf32>
      %99 = vector.shape_cast %98 : vector<8x128xf32> to vector<1x8x128xf32>
      %cst_55 = arith.constant dense<0.000000e+00> : vector<1xf32>
      %100 = vector.multi_reduction <add>, %99, %cst_55 [1, 2] : vector<1x8x128xf32> to vector<1xf32>
      %101 = vector.shape_cast %100 : vector<1xf32> to vector<1x1x1xf32>
      %102 = vector.extract %101[0, 0, 0] : f32 from vector<1x1x1xf32>
      %103 = vector.broadcast %102 : f32 to vector<1x1x1x1xf32>
      %104 = arith.addf %96, %103 : vector<1x1x1x1xf32>
      %c0_56 = arith.constant 0 : index
      %c0_57 = arith.constant 0 : index
      %c0_58 = arith.constant 0 : index
      %c0_59 = arith.constant 0 : index
      %105 = vector.load %arg6[%c0_56, %c0_57, %c0_58, %c0_59] : memref<1x1x1x1xf32, #tpu.memory_space<vmem>>, vector<1x1x1x1xf32>
      tpu.vector_store %arg6[%c0_56, %c0_57, %c0_58, %c0_59], %104 {strides = array<i32>} : memref<1x1x1x1xf32, #tpu.memory_space<vmem>>, vector<1x1x1x1xf32>,
      %c0_60 = arith.constant 0 : index
      %c0_61 = arith.constant 0 : index
      %c0_62 = arith.constant 0 : index
      %c0_63 = arith.constant 0 : index
      %106 = vector.load %arg7[%c0_60, %c0_61, %c0_62, %c0_63] : memref<1x1x1x1xf32, #tpu.memory_space<vmem>>, vector<1x1x1x1xf32>
      %c1_64 = arith.constant 1 : index
      %c0_65 = arith.constant 0 : index
      %c0_66 = arith.constant 0 : index
      %107 = vector.load %arg8[%c1_64, %c0_65, %c0_66] : memref<2x8x128xf32, #tpu.memory_space<vmem>>, vector<1x8x128xf32>
      %108 = vector.shape_cast %107 : vector<1x8x128xf32> to vector<8x128xf32>
      %109 = vector.shape_cast %108 : vector<8x128xf32> to vector<1x8x128xf32>
      %cst_67 = arith.constant dense<0.000000e+00> : vector<1xf32>
      %110 = vector.multi_reduction <add>, %109, %cst_67 [1, 2] : vector<1x8x128xf32> to vector<1xf32>
      %111 = vector.shape_cast %110 : vector<1xf32> to vector<1x1x1xf32>
      %112 = vector.extract %111[0, 0, 0] : f32 from vector<1x1x1xf32>
      %113 = vector.broadcast %112 : f32 to vector<1x1x1x1xf32>
      %114 = arith.addf %106, %113 : vector<1x1x1x1xf32>
      %c0_68 = arith.constant 0 : index
      %c0_69 = arith.constant 0 : index
      %c0_70 = arith.constant 0 : index
      %c0_71 = arith.constant 0 : index
      %115 = vector.load %arg7[%c0_68, %c0_69, %c0_70, %c0_71] : memref<1x1x1x1xf32, #tpu.memory_space<vmem>>, vector<1x1x1x1xf32>
      tpu.vector_store %arg7[%c0_68, %c0_69, %c0_70, %c0_71], %114 {strides = array<i32>} : memref<1x1x1x1xf32, #tpu.memory_space<vmem>>, vector<1x1x1x1xf32>,
    } else {
    }
    return
  }
  func.func @transform_0(%arg0: i32, %arg1: i32, %arg2: i32, %arg3: memref<4xf32, #tpu.memory_space<smem>>) -> (i32, i32, i32, i32) {
    %c1_i32 = arith.constant 1 : i32
    %0 = arith.muli %arg1, %c1_i32 : i32
    %1 = arith.addi %0, %arg2 : i32
    %c0_i32 = arith.constant 0 : i32
    %c0_i32_0 = arith.constant 0 : i32
    %c0_i32_1 = arith.constant 0 : i32
    return %arg0, %c0_i32, %1, %c0_i32_0 : i32, i32, i32, i32
  }
  func.func @transform_1(%arg0: i32, %arg1: i32, %arg2: i32, %arg3: memref<4xf32, #tpu.memory_space<smem>>) -> (i32, i32, i32, i32) {
    %c1_i32 = arith.constant 1 : i32
    %0 = arith.muli %arg1, %c1_i32 : i32
    %1 = arith.addi %0, %arg2 : i32
    %c0_i32 = arith.constant 0 : i32
    %c0_i32_0 = arith.constant 0 : i32
    %c0_i32_1 = arith.constant 0 : i32
    return %arg0, %c0_i32, %1, %c0_i32_0 : i32, i32, i32, i32
  }
  func.func @transform_2(%arg0: i32, %arg1: i32, %arg2: i32, %arg3: memref<4xf32, #tpu.memory_space<smem>>) -> (i32, i32, i32, i32) {
    %c0_i32 = arith.constant 0 : i32
    %c0_i32_0 = arith.constant 0 : i32
    %c0_i32_1 = arith.constant 0 : i32
    return %arg0, %arg1, %c0_i32, %c0_i32_0 : i32, i32, i32, i32
  }
  func.func @transform_3(%arg0: i32, %arg1: i32, %arg2: i32, %arg3: memref<4xf32, #tpu.memory_space<smem>>) -> (i32, i32, i32, i32) {
    %c0_i32 = arith.constant 0 : i32
    %c0_i32_0 = arith.constant 0 : i32
    %c0_i32_1 = arith.constant 0 : i32
    return %arg0, %arg1, %c0_i32, %c0_i32_0 : i32, i32, i32, i32
  }
}

</mosaic_0001>

<llo_original>
// kernel: tpu_custom_call.1
$region0: #{tpu_custom_call.1}
  #allocation0 [shape = 'u32[]', space=smem, size = 0x4, offset = 0x4, fixed_abs, tag = 'smem constant byte address 0x4 - core index']
  #allocation1 [shape = 'u32[144,128]{1,0:T(1,128)}', space=vmem, size = 0x12000, scoped, tag = 'internal scratch']
  #allocation2 [shape = 'f32[2,8,128]{2,1,0:T(8,128)}', space=vmem, size = 0x2000, scoped, tag = 'scratch operand']
  #allocation3 [shape = 's32[1]{0}', space=sflag, size = 0x4, scoped, tag = 'scoped memory for tpu_custom_call.1']
  #allocation4 [shape = 'u8[512]{0}', space=smem, size = 0x200, scoped, tag = 'prefetched SMEM operand 0']
  %s0 = inlined_call_operand.hbm [shape: f32[4], index: 0, kind: input, shape index: {}]
  %s1 = inlined_call_operand.hbm [shape: f32[2,4,8,128], index: 1, kind: input, shape index: {}]
  %s2 = inlined_call_operand.hbm [shape: s32[2,1,8,128], index: 2, kind: input, shape index: {}]
  %s3 = inlined_call_operand.vmem [shape: f32[2,1,1,1], index: 3, kind: output, shape index: {0}]
  %s4 = inlined_call_operand.vmem [shape: f32[2,1,1,1], index: 4, kind: output, shape index: {1}]
  %5 = xla_tuple %s3, %s4
  %s6 = sld [smem:[#allocation0]]
  $region65: #{tpu_custom_call.1} parent=0
    _
  %s8 = ssub.s32 1, %s6
  %s9 = scalar_select 0, %s8, %s6
  %11 = dma.hbm_to_smem %s0, 16, [#allocation4], [#allocation3]
  %12 = dma.done [#allocation3], 16
  %13 = sfence
  $region1: #{tpu_custom_call.1} parent=0
    #allocation5 [shape = 'u8[32768]{0}', space=vmem, size = 0x8000, scoped, tag = 'input window, operand 1']
    #allocation6 [shape = 's32[2]{0}', space=sflag, size = 0x8, scoped, tag = 'scoped memory for tpu_custom_call.1']
    #allocation7 [shape = 'u8[8192]{0}', space=vmem, size = 0x2000, scoped, tag = 'input window, operand 2']
    #allocation8 [shape = 's32[2]{0}', space=sflag, size = 0x8, scoped, tag = 'scoped memory for tpu_custom_call.1']
    %14 = vsyncpa [#allocation6], 0
    %s15 = scalar_lea.sflag [#allocation6], 1
    %16 = vsyncpa %s15, 0
    %17 = vsyncpa [#allocation8], 0
    %s18 = scalar_lea.sflag [#allocation8], 1
    %19 = vsyncpa %s18, 0
    loop: start=0, step=1, limit=4
    $region2: #{tpu_custom_call.1} parent=1 // loop_pre_header
      _
    $region3: #{tpu_custom_call.1} parent=1 // loop_header
      %s21 = sphi 0, %s25
      %p22 = scmp.ge.s32.totalorder %s21, 4
      %s28 = sphi 0, %s47
      %s29 = sphi 0, %s43
      %s30 = sphi 0, %s39
      %s31 = sphi 0, %s28
      %s32 = sphi 0, %s29
      %s33 = sphi 0, %s30
      %s34 = sphi 0, %s31
      %s35 = sphi 0, %s32
      %s36 = sphi 0, %s33
      %s54 = sphi 0, %s56
      %s57 = sphi 0, %s54
      %s58 = sphi 0, %s57
      %s74 = sphi 0, %s58
      %s84 = sphi 0, %s86
      %s87 = sphi 0, %s84
      %s88 = sphi 0, %s87
      %s104 = sphi 0, %s88
      %s112 = sphi 0, %s114
      %s115 = sphi 0, %s112
      %s116 = sphi 0, %s115
      %s132 = sphi 0, %s116
      %s140 = sphi 0, %s142
      %s143 = sphi 0, %s140
      %s144 = sphi 0, %s143
      %s160 = sphi 0, %s144
    $region4: #{tpu_custom_call.1} parent=1 // loop_header_branch
      %24 = sbr.rel (%p22) target = $region8
    $region5: #{tpu_custom_call.1} parent=1 // loop_body
      %s26 = ssub.s32 %s21, 1
      %s27 = ssub.s32 %s21, 2
      %s37 = sadd.s32 1, %s30
      %p38 = scmp.ge.s32.totalorder %s37, 1
      %s39 = scalar_select %p38, 0, %s37
      %s40 = sadd.s32 1, %s29
      %s41 = scalar_select %p38, %s40, %s29
      %p42 = scmp.ge.s32.totalorder %s41, 1
      %s43 = scalar_select %p42, 0, %s41
      %s44 = sadd.s32 1, %s28
      %s45 = scalar_select %p42, %s44, %s28
      %p46 = scmp.ge.s32.totalorder %s45, 2
      %s47 = scalar_select %p46, 0, %s45
      %s48 = sadd.s32 %s29, %s30
      %s49 = sadd.s32 %s43, %s39
      %s50 = ssub.s32 %s28, %s47
      %s51 = ssub.s32 %s48, %s49
      %s52 = sor.u32 %s50, %s51
      %p53 = scmp.eq.s32.totalorder %s52, 0
      %s55 = sadd.s32 %s54, 1
      %s56 = scalar_select %p53, %s54, %s55
      %p59 = pneg %p53
      %p60 = scmp.eq.s32.totalorder %s21, 1
      %p61 = por %p59, %p60
      %p62 = scmp.ne.s32.totalorder %s54, %s57
      %p63 = scmp.eq.s32.totalorder %s21, 0
      %p64 = por %p62, %p63
      %p65 = scmp.ne.s32.totalorder %s54, %s57
      %p66 = scmp.eq.s32.totalorder %s26, 1
      %p67 = por %p65, %p66
      %p68 = scmp.ne.s32.totalorder %s57, %s58
      %p69 = scmp.eq.s32.totalorder %s26, 0
      %p70 = por %p68, %p69
      %p71 = scmp.ne.s32.totalorder %s57, %s58
      %p72 = scmp.eq.s32.totalorder %s27, 1
      %p73 = por %p71, %p72
      %p75 = scmp.ne.s32.totalorder %s58, %s74
      %p76 = scmp.eq.s32.totalorder %s27, 0
      %p77 = por %p75, %p76
      %s78 = sadd.s32 %s29, %s30
      %s79 = sadd.s32 %s43, %s39
      %s80 = ssub.s32 %s28, %s47
      %s81 = ssub.s32 %s78, %s79
      %s82 = sor.u32 %s80, %s81
      %p83 = scmp.eq.s32.totalorder %s82, 0
      %s85 = sadd.s32 %s84, 1
      %s86 = scalar_select %p83, %s84, %s85
      %p89 = pneg %p83
      %p90 = scmp.eq.s32.totalorder %s21, 1
      %p91 = por %p89, %p90
      %p92 = scmp.ne.s32.totalorder %s84, %s87
      %p93 = scmp.eq.s32.totalorder %s21, 0
      %p94 = por %p92, %p93
      %p95 = scmp.ne.s32.totalorder %s84, %s87
      %p96 = scmp.eq.s32.totalorder %s26, 1
      %p97 = por %p95, %p96
      %p98 = scmp.ne.s32.totalorder %s87, %s88
      %p99 = scmp.eq.s32.totalorder %s26, 0
      %p100 = por %p98, %p99
      %p101 = scmp.ne.s32.totalorder %s87, %s88
      %p102 = scmp.eq.s32.totalorder %s27, 1
      %p103 = por %p101, %p102
      %p105 = scmp.ne.s32.totalorder %s88, %s104
      %p106 = scmp.eq.s32.totalorder %s27, 0
      %p107 = por %p105, %p106
      %s108 = ssub.s32 %s28, %s47
      %s109 = ssub.s32 %s29, %s43
      %s110 = sor.u32 %s108, %s109
      %p111 = scmp.eq.s32.totalorder %s110, 0
      %s113 = sadd.s32 %s112, 1
      %s114 = scalar_select %p111, %s112, %s113
      %p117 = pneg %p111
      %p118 = scmp.eq.s32.totalorder %s21, 1
      %p119 = por %p117, %p118
      %p120 = scmp.ne.s32.totalorder %s112, %s115
      %p121 = scmp.eq.s32.totalorder %s21, 0
      %p122 = por %p120, %p121
      %p123 = scmp.ne.s32.totalorder %s112, %s115
      %p124 = scmp.eq.s32.totalorder %s26, 1
      %p125 = por %p123, %p124
      %p126 = scmp.ne.s32.totalorder %s115, %s116
      %p127 = scmp.eq.s32.totalorder %s26, 0
      %p128 = por %p126, %p127
      %p129 = scmp.ne.s32.totalorder %s115, %s116
      %p130 = scmp.eq.s32.totalorder %s27, 1
      %p131 = por %p129, %p130
      %p133 = scmp.ne.s32.totalorder %s116, %s132
      %p134 = scmp.eq.s32.totalorder %s27, 0
      %p135 = por %p133, %p134
      %s136 = ssub.s32 %s28, %s47
      %s137 = ssub.s32 %s29, %s43
      %s138 = sor.u32 %s136, %s137
      %p139 = scmp.eq.s32.totalorder %s138, 0
      %s141 = sadd.s32 %s140, 1
      %s142 = scalar_select %p139, %s140, %s141
      %p145 = pneg %p139
      %p146 = scmp.eq.s32.totalorder %s21, 1
      %p147 = por %p145, %p146
      %p148 = scmp.ne.s32.totalorder %s140, %s143
      %p149 = scmp.eq.s32.totalorder %s21, 0
      %p150 = por %p148, %p149
      %p151 = scmp.ne.s32.totalorder %s140, %s143
      %p152 = scmp.eq.s32.totalorder %s26, 1
      %p153 = por %p151, %p152
      %p154 = scmp.ne.s32.totalorder %s143, %s144
      %p155 = scmp.eq.s32.totalorder %s26, 0
      %p156 = por %p154, %p155
      %p157 = scmp.ne.s32.totalorder %s143, %s144
      %p158 = scmp.eq.s32.totalorder %s27, 1
      %p159 = por %p157, %p158
      %p161 = scmp.ne.s32.totalorder %s144, %s160
      %p162 = scmp.eq.s32.totalorder %s27, 0
      %p163 = por %p161, %p162
      %p164 = scmp.le.s32.totalorder 1, %s21
      %p165 = scmp.lt.s32.totalorder %s21, 3
      %p166 = pnand %p164, %p165
      %p167 = pneg %p166
      // Predicated region
      $region9: #{tpu_custom_call.1} parent=5 // pred_check
        _
      $region10: #{tpu_custom_call.1} parent=5 // pred_check_branch
        %169 = sbr.rel (%p166) target = $region12
      $region11: #{tpu_custom_call.1} parent=5 // pred_region
        %s170 = ssub.s32 %s21, 1
      $region12: #{tpu_custom_call.1} parent=5 // pred_fallthru
        _
      %p171 = scmp.lt.s32.totalorder %s21, 2
      // Predicated region
      $region13: #{tpu_custom_call.1} parent=5 // pred_check
        %p172 = pneg %p171
      $region14: #{tpu_custom_call.1} parent=5 // pred_check_branch
        %174 = sbr.rel (%p172) target = $region16
      $region15: #{tpu_custom_call.1} parent=5 // pred_region
        // Predicated region
        $region17: #{tpu_custom_call.1} parent=15 // pred_check
          %p175 = pneg %p64
        $region18: #{tpu_custom_call.1} parent=15 // pred_check_branch
          %177 = sbr.rel (%p175) target = $region20
        $region19: #{tpu_custom_call.1} parent=15 // pred_region
          %s178 = sand.u32 %s54, 1
          %s179 = scalar_lea.sflag [#allocation6], %s178
          %s180 = sand.u32 %s54, 1
          %s181 = smul.addr %s180, 32
          %s182 = scalar_lea.vmem [#allocation5], %s181
          %s183 = sadd.s32 %s29, %s30
          %s185 = ssub.s32 512, 512
          %186 = vsyncadd %s179, %s185
          %s187 = smul.addr %s28, 4
          %s188 = sadd.s32 %s183, %s187
          %s189 = smul.addr %s188, 128
          %s190 = scalar_lea.hbm %s1, %s189
          %s191 = sshll.u32 %s182, 4
          %s192 = int_to_ptr.vmem [resolvable:$true] %s191
          %197 = dma.hbm_to_vmem [thread:$0]  %s190, 512, %s192, %s179, 128, 128, 8
        $region20: #{tpu_custom_call.1} parent=15 // pred_fallthru
          _
        // Predicated region
        $region21: #{tpu_custom_call.1} parent=15 // pred_check
          %p198 = pneg %p94
        $region22: #{tpu_custom_call.1} parent=15 // pred_check_branch
          %200 = sbr.rel (%p198) target = $region24
        $region23: #{tpu_custom_call.1} parent=15 // pred_region
          %s201 = sand.u32 %s84, 1
          %s202 = scalar_lea.sflag [#allocation8], %s201
          %s203 = sand.u32 %s84, 1
          %s204 = smul.addr %s203, 8
          %s205 = scalar_lea.vmem [#allocation7], %s204
          %s206 = sadd.s32 %s29, %s30
          %s208 = ssub.s32 128, 128
          %209 = vsyncadd %s202, %s208
          %s210 = sadd.s32 %s206, %s28
          %s211 = smul.addr %s210, 128
          %s212 = scalar_lea.hbm %s2, %s211
          %s214 = sshll.u32 %s205, 4
          %s215 = int_to_ptr.vmem [resolvable:$true] %s214
          %217 = dma.hbm_to_vmem [thread:$0]  %s212, 128, %s215, %s202
        $region24: #{tpu_custom_call.1} parent=15 // pred_fallthru
          _
      $region16: #{tpu_custom_call.1} parent=5 // pred_fallthru
        _
      %p218 = scmp.le.s32.totalorder 1, %s21
      %p219 = scmp.lt.s32.totalorder %s21, 3
      %p220 = pnand %p218, %p219
      %p221 = pneg %p220
      // Predicated region
      $region25: #{tpu_custom_call.1} parent=5 // pred_check
        _
      $region26: #{tpu_custom_call.1} parent=5 // pred_check_branch
        %223 = sbr.rel (%p220) target = $region28
      $region27: #{tpu_custom_call.1} parent=5 // pred_region
        %s224 = ssub.s32 %s21, 1
        %s225 = sand.u32 %s57, 1
        %s226 = scalar_lea.sflag [#allocation6], %s225
        %s227 = sand.u32 %s57, 1
        %s228 = smul.addr %s227, 32
        %s229 = scalar_lea.vmem [#allocation5], %s228
        // Predicated region
        $region29: #{tpu_custom_call.1} parent=27 // pred_check
          %p230 = pneg %p70
        $region30: #{tpu_custom_call.1} parent=27 // pred_check_branch
          %232 = sbr.rel (%p230) target = $region32
        $region31: #{tpu_custom_call.1} parent=27 // pred_region
          %233 = dma.done %s226, 512
        $region32: #{tpu_custom_call.1} parent=27 // pred_fallthru
          _
        %s234 = sand.u32 %s87, 1
        %s235 = scalar_lea.sflag [#allocation8], %s234
        %s236 = sand.u32 %s87, 1
        %s237 = smul.addr %s236, 8
        %s238 = scalar_lea.vmem [#allocation7], %s237
        // Predicated region
        $region33: #{tpu_custom_call.1} parent=27 // pred_check
          %p239 = pneg %p100
        $region34: #{tpu_custom_call.1} parent=27 // pred_check_branch
          %241 = sbr.rel (%p239) target = $region36
        $region35: #{tpu_custom_call.1} parent=27 // pred_region
          %242 = dma.done %s235, 128
        $region36: #{tpu_custom_call.1} parent=27 // pred_fallthru
          _
        %s243 = sand.u32 %s57, 1
        %s244 = scalar_lea.sflag [#allocation6], %s243
        %s245 = sand.u32 %s57, 1
        %s246 = smul.addr %s245, 32
        %s247 = scalar_lea.vmem [#allocation5], %s246
        %p248 = pneg %p70
        %p249 = pneg %p67
        %s250 = sand.u32 %s87, 1
        %s251 = scalar_lea.sflag [#allocation8], %s250
        %s252 = sand.u32 %s87, 1
        %s253 = smul.addr %s252, 8
        %s254 = scalar_lea.vmem [#allocation7], %s253
        %p255 = pneg %p100
        %p256 = pneg %p97
        %p257 = pneg %p128
        %p258 = pneg %p125
        %p259 = scmp.lt.s32.totalorder %s31, 1
        %s260 = scalar_select %p259, %s31, 1
        %p261 = scmp.lt.s32.totalorder %s32, 0
        %s262 = scalar_select %p261, %s32, 0
        %s263 = sadd.s32 %s262, %s260
        %s264 = scalar_lea.vmem %s3, %s263
        %p265 = pneg %p156
        %p266 = pneg %p153
        %p267 = scmp.lt.s32.totalorder %s31, 1
        %s268 = scalar_select %p267, %s31, 1
        %p269 = scmp.lt.s32.totalorder %s32, 0
        %s270 = scalar_select %p269, %s32, 0
        %s271 = sadd.s32 %s270, %s268
        %s272 = scalar_lea.vmem %s4, %s271
        %s273 = sadd.s32 %s32, %s33
        %s274 = sadd.s32 %s32, %s33
        %p275 = scmp.lt.s32.totalorder %s31, 1
        %s276 = scalar_select %p275, %s31, 1
        %p277 = scmp.lt.s32.totalorder %s32, 0
        %s278 = scalar_select %p277, %s32, 0
        %s279 = sadd.s32 %s278, %s276
        %s280 = scalar_lea.vmem %s3, %s279
        %p281 = scmp.lt.s32.totalorder %s31, 1
        %s282 = scalar_select %p281, %s31, 1
        %p283 = scmp.lt.s32.totalorder %s32, 0
        %s284 = scalar_select %p283, %s32, 0
        %s285 = sadd.s32 %s284, %s282
        %s286 = scalar_lea.vmem %s4, %s285
        %p287 = scmp.eq.s32.totalorder %s33, 0
        // Predicated region
        $region37: #{tpu_custom_call.1} parent=27 // pred_check
          %p288 = pneg %p287
        $region38: #{tpu_custom_call.1} parent=27 // pred_check_branch
          %290 = sbr.rel (%p288) target = $region40
        $region39: #{tpu_custom_call.1} parent=27 // pred_region
          %291 = vst [vmem:[#allocation2] sm:$0xff] 0.0
          %292 = vst [vmem:[#allocation2 + $0x8] sm:$0xff] 0.0
          %vm293 = vcmask 0
          %294 = vst.msk [vmem:[%s280] sm:$0x1] %vm293, 0.0
          %295 = vst.msk [vmem:[%s286] sm:$0x1] %vm293, 0.0
        $region40: #{tpu_custom_call.1} parent=27 // pred_fallthru
          _
        %s296 = sld [smem:[#allocation4]]
        %s297 = sld [smem:[#allocation4 + $0x1]]
        %s298 = sld [smem:[#allocation4 + $0x2]]
        %s299 = sld [smem:[#allocation4 + $0x3]]
        %v300 = vld [vmem:[%s238] sm:$0xff]
        %v301 = vld [vmem:[%s229] sm:$0xff]
        %s302 = sadd.s32 0, 8
        %s303 = scalar_lea.vmem %s229, %s302 [#allocation5]
        %v304 = vld [vmem:[%s303] sm:$0xff]
        %v305 = vmax.f32 %v301, %v304
        %s306 = sadd.s32 0, 16
        %s307 = scalar_lea.vmem %s229, %s306 [#allocation5]
        %v308 = vld [vmem:[%s307] sm:$0xff]
        %v309 = vmax.f32 %v305, %v308
        %s310 = sadd.s32 0, 24
        %s311 = scalar_lea.vmem %s229, %s310 [#allocation5]
        %v312 = vld [vmem:[%s311] sm:$0xff]
        %v313 = vmax.f32 %v309, %v312
        %v314 = vsub.f32 %v301, %v313
        %v315 = vmul.f32 %v314, 1.442695
        %v316 = vpow.pop %v315
        %v317 = vadd.f32 %v316, 0.0
        %vm318 = vcmp.eq.s32.totalorder %v300, 0
        %v319 = vsel %vm318, %v301, 0.0
        %v320 = vstv %s296
        %v321 = vsel %vm318, %v320, 0.0
        %v322 = vsub.f32 %v304, %v313
        %v323 = vmul.f32 %v322, 1.442695
        %v324 = vpow.pop %v323
        %v325 = vadd.f32 %v317, %v324
        %vm326 = vcmp.eq.s32.totalorder %v300, 1
        %v327 = vsel %vm326, %v304, %v319
        %v328 = vstv %s297
        %v329 = vsel %vm326, %v328, %v321
        %v330 = vsub.f32 %v308, %v313
        %v331 = vmul.f32 %v330, 1.442695
        %v332 = vpow.pop %v331
        %v333 = vadd.f32 %v325, %v332
        %vm334 = vcmp.eq.s32.totalorder %v300, 2
        %v335 = vsel %vm334, %v308, %v327
        %v336 = vstv %s298
        %v337 = vsel %vm334, %v336, %v329
        %v338 = vsub.f32 %v312, %v313
        %v339 = vmul.f32 %v338, 1.442695
        %v340 = vpow.pop %v339
        %v341 = vadd.f32 %v333, %v340
        %vm342 = vcmp.eq.s32.totalorder %v300, 3
        %v343 = vsel %vm342, %v312, %v335
        %v344 = vstv %s299
        %v345 = vsel %vm342, %v344, %v337
        %v346 = vlog2.pop %v341
        %v347 = vmul.f32 %v346, 0.6931472
        %v348 = vadd.f32 %v313, %v347
        %v349 = vsub.f32 %v348, %v343
        %v350 = vmul.f32 %v345, %v349
        %v351 = vadd.f32 %v350, 0.0
        %v352 = vadd.f32 %v345, 0.0
        %v353 = vld [vmem:[#allocation2] sm:$0xff]
        %v354 = vadd.f32 %v353, %v351
        %355 = vst [vmem:[#allocation2] sm:$0xff] %v354
        %s356 = scalar_lea.vmem [#allocation2], 8
        %v357 = vld [vmem:[%s356] sm:$0xff]
        %v358 = vadd.f32 %v357, %v352
        %359 = vst [vmem:[%s356] sm:$0xff] %v358
        // Predicated region
        $region41: #{tpu_custom_call.1} parent=27 // pred_check
          %p360 = pneg %p287
        $region42: #{tpu_custom_call.1} parent=27 // pred_check_branch
          %362 = sbr.rel (%p360) target = $region44
        $region43: #{tpu_custom_call.1} parent=27 // pred_region
          %v363 = vld [vmem:[%s280] sm:$0x1]
          %v364 = vld [vmem:[#allocation2] sm:$0xff]
          %365 = vadd.xlane.f32.xlu0 %v364
          %v366 = vpop.xlane.xlu0 %365
          %v367 = vrot.slane %v366, 4
          %v368 = vadd.f32 %v366, %v367
          %v369 = vrot.slane %v368, 2
          %v370 = vadd.f32 %v368, %v369
          %v371 = vrot.slane %v370, 1
          %v372 = vadd.f32 %v370, %v371
          %s373 = vtos %v372
          %v374 = vstv %s373
          %v375 = vadd.f32 %v363, %v374
          %vm376 = vcmask 0
          %377 = vst.msk [vmem:[%s280] sm:$0x1] %vm376, %v375
          %v378 = vld [vmem:[%s286] sm:$0x1]
          %v379 = vld [vmem:[%s356] sm:$0xff]
          %380 = vadd.xlane.f32.xlu0 %v379
          %v381 = vpop.xlane.xlu0 %380
          %v382 = vrot.slane %v381, 4
          %v383 = vadd.f32 %v381, %v382
          %v384 = vrot.slane %v383, 2
          %v385 = vadd.f32 %v383, %v384
          %v386 = vrot.slane %v385, 1
          %v387 = vadd.f32 %v385, %v386
          %s388 = vtos %v387
          %v389 = vstv %s388
          %v390 = vadd.f32 %v378, %v389
          %391 = vst.msk [vmem:[%s286] sm:$0x1] %vm376, %v390
        $region44: #{tpu_custom_call.1} parent=27 // pred_fallthru
          _
        %p392 = scmp.lt.s32.totalorder %s31, 1
        %s393 = scalar_select %p392, %s31, 1
        %p394 = scmp.lt.s32.totalorder %s32, 0
        %s395 = scalar_select %p394, %s32, 0
        %s396 = sadd.s32 %s395, %s393
        %s397 = scalar_lea.vmem %s3, %s396
        %p398 = scmp.lt.s32.totalorder %s31, 1
        %s399 = scalar_select %p398, %s31, 1
        %p400 = scmp.lt.s32.totalorder %s32, 0
        %s401 = scalar_select %p400, %s32, 0
        %s402 = sadd.s32 %s401, %s399
        %s403 = scalar_lea.vmem %s4, %s402
        // Predicated region
        $region45: #{tpu_custom_call.1} parent=27 // pred_check
          %p404 = pneg %p125
        $region46: #{tpu_custom_call.1} parent=27 // pred_check_branch
          %406 = sbr.rel (%p404) target = $region48
        $region47: #{tpu_custom_call.1} parent=27 // pred_region
          _
        $region48: #{tpu_custom_call.1} parent=27 // pred_fallthru
          _
        // Predicated region
        $region49: #{tpu_custom_call.1} parent=27 // pred_check
          %p407 = pneg %p153
        $region50: #{tpu_custom_call.1} parent=27 // pred_check_branch
          %409 = sbr.rel (%p407) target = $region52
        $region51: #{tpu_custom_call.1} parent=27 // pred_region
          _
        $region52: #{tpu_custom_call.1} parent=27 // pred_fallthru
          _
      $region28: #{tpu_custom_call.1} parent=5 // pred_fallthru
        _
      %p410 = scmp.le.s32.totalorder 2, %s21
      // Predicated region
      $region53: #{tpu_custom_call.1} parent=5 // pred_check
        %p411 = pneg %p410
      $region54: #{tpu_custom_call.1} parent=5 // pred_check_branch
        %413 = sbr.rel (%p411) target = $region56
      $region55: #{tpu_custom_call.1} parent=5 // pred_region
        %s414 = ssub.s32 %s21, 2
        // Predicated region
        $region57: #{tpu_custom_call.1} parent=55 // pred_check
          %p415 = pneg %p131
        $region58: #{tpu_custom_call.1} parent=55 // pred_check_branch
          %417 = sbr.rel (%p415) target = $region60
        $region59: #{tpu_custom_call.1} parent=55 // pred_region
          %p418 = scmp.lt.s32.totalorder %s34, 1
          %s419 = scalar_select %p418, %s34, 1
          %p420 = scmp.lt.s32.totalorder %s35, 0
          %s421 = scalar_select %p420, %s35, 0
          %s422 = sadd.s32 %s421, %s419
          %s423 = scalar_lea.vmem %s3, %s422
        $region60: #{tpu_custom_call.1} parent=55 // pred_fallthru
          _
        // Predicated region
        $region61: #{tpu_custom_call.1} parent=55 // pred_check
          %p424 = pneg %p159
        $region62: #{tpu_custom_call.1} parent=55 // pred_check_branch
          %426 = sbr.rel (%p424) target = $region64
        $region63: #{tpu_custom_call.1} parent=55 // pred_region
          %p427 = scmp.lt.s32.totalorder %s34, 1
          %s428 = scalar_select %p427, %s34, 1
          %p429 = scmp.lt.s32.totalorder %s35, 0
          %s430 = scalar_select %p429, %s35, 0
          %s431 = sadd.s32 %s430, %s428
          %s432 = scalar_lea.vmem %s4, %s431
        $region64: #{tpu_custom_call.1} parent=55 // pred_fallthru
          _
      $region56: #{tpu_custom_call.1} parent=5 // pred_fallthru
        _
    $region6: #{tpu_custom_call.1} parent=1 // loop_footer
      %s25 = sadd.s32 1, %s21
    $region7: #{tpu_custom_call.1} parent=1 // loop_footer_branch
      %20 = sbr.rel target = $region3
    $region8: #{tpu_custom_call.1} parent=1 // loop_exit
      _
    %433 = vsyncpa [#allocation6], 1
    %s434 = scalar_lea.sflag [#allocation6], 1
    %435 = vsyncpa %s434, 1
    %436 = vsyncpa [#allocation8], 1
    %s437 = scalar_lea.sflag [#allocation8], 1
    %438 = vsyncpa %s437, 1

</llo_original>
